<compile_context>
chip_gen: v5e
topology: v5e:2x2
jax: 0.10.0
libtpu: 0.0.40
codegen_flags: <defaults>
</compile_context>

<pallas_src>
import functools

import jax
import jax.numpy as jnp
from jax.experimental import pallas as pl
from jax.experimental.pallas import tpu as pltpu


def _neuron_kernel(x_ref, w_ref, b_ref, o_ref):
    # x_ref: [D, TILE_B]  (batch on lanes), w_ref: [D, 1], b_ref: [1, 1] in SMEM,
    # o_ref: [1, TILE_B]  (lane-dense output)
    x = x_ref[...]                     # (D, TILE_B) f32
    w = w_ref[...]                     # (D, 1)      f32, broadcast along lanes
    b = b_ref[0, 0]                    # scalar from SMEM (essentially free)
    z = jnp.sum(x * w, axis=0, keepdims=True) + b      # (1, TILE_B), sublane reduce
    o_ref[...] = jax.nn.sigmoid(z).astype(o_ref.dtype)


def neuron_i_int(x, weight, bias, i_input: int, *, max_tile_b: int = 1024):
    """Pallas equivalent of NeuronIInt.forward.

    x:       [batch, n_dims]
    weight:  [n_targets, n_dims]   (PyTorch Linear convention)
    bias:    [n_targets]
    i_input: static int column selector
    returns  [batch] float32
    """
    batch, n_dims = x.shape
    i_input = int(i_input)

    # Pre-select the single neuron actually returned by the module.
    w_sel = weight[i_input].astype(jnp.float32).reshape(n_dims, 1)   # (D, 1)
    b_sel = bias[i_input].astype(jnp.float32).reshape(1, 1)          # (1, 1) -> SMEM

    # Batch onto the lane axis (layout plumbing in the wrapper, lane-dense in-kernel).
    x_t = x.astype(jnp.float32).T                                    # (D, batch)

    # Tile the batch/lane axis: multiple of 128, capped at max_tile_b.
    tile_b = min(max_tile_b, 128 * pl.cdiv(batch, 128))
    padded = pl.cdiv(batch, tile_b) * tile_b
    if padded != batch:
        x_t = jnp.pad(x_t, ((0, 0), (0, padded - batch)))
    grid = (padded // tile_b,)

    cost = pl.CostEstimate(
        flops=2 * padded * n_dims,                       # mul + add per element
        transcendentals=padded,                          # sigmoid exp per row
        bytes_accessed=padded * n_dims * 4 + padded * 4 + n_dims * 4 + 4,
    )

    out = pl.pallas_call(
        _neuron_kernel,
        out_shape=jax.ShapeDtypeStruct((1, padded), jnp.float32),
        grid_spec=pltpu.PrefetchScalarGridSpec(
            num_scalar_prefetch=0,
            grid=grid,
            in_specs=[
                # x tile: batch (lanes) indexed by the grid, D stays whole.
                pl.BlockSpec((n_dims, tile_b), lambda i: (0, i)),
                # selected weight column: resident across the whole grid.
                pl.BlockSpec((n_dims, 1), lambda i: (0, 0)),
                # bias scalar: SMEM, no VMEM tile / DMA per step.
                pl.BlockSpec(memory_space=pltpu.MemorySpace.SMEM),
            ],
            out_specs=pl.BlockSpec((1, tile_b), lambda i: (0, i)),
        ),
        compiler_params=pltpu.CompilerParams(
            dimension_semantics=("parallel",),           # shard across v7x's 2 TCs
        ),
        cost_estimate=cost,
    )(x_t, w_sel, b_sel)

    return out[0, :batch]


if __name__ == "__main__":
    n_dims, n_targets = 5, 3
    batch = 8
    i_input = 2

    key = jax.random.PRNGKey(0)
    kx, kw, kb = jax.random.split(key, 3)

    # Deterministic parameter init (PyTorch Linear-style uniform bound).
    bound = 1.0 / jnp.sqrt(jnp.float32(n_dims))
    weight = jax.random.uniform(kw, (n_targets, n_dims), jnp.float32, -bound, bound)
    bias = jax.random.uniform(kb, (n_targets,), jnp.float32, -bound, bound)

    x = jax.random.normal(kx, (batch, n_dims), jnp.float32)

    out = neuron_i_int(x, weight, bias, i_input)
    out = jax.block_until_ready(out)

    # Pure-JAX reference check.
    ref = jax.nn.sigmoid(x @ weight.T + bias)[:, i_input]
    assert out.shape == (batch,)
    assert jnp.allclose(out, ref, atol=1e-5, rtol=1e-5)

    print("KERNEL_OK")
</pallas_src>

<mosaic_0001>
module attributes {stable_mosaic.version = 11 : i64} {
  func.func @_neuron_kernel(%arg0: i32, %arg1: memref<5x128xf32, #tpu.memory_space<vmem>>, %arg2: memref<5x1xf32, #tpu.memory_space<vmem>>, %arg3: memref<1x1xf32, #tpu.memory_space<smem>>, %arg4: memref<1x128xf32, #tpu.memory_space<vmem>>) attributes {dimension_semantics = [#tpu.dimension_semantics<parallel>], iteration_bounds = array<i64: 1>, scalar_prefetch = 0 : i64, scratch_operands = 0 : i64, tpu.core_type = #tpu.core_type<tc>, window_params = [{transform_indices = @transform_0, window_bounds = array<i64: 5, 128>}, {pipeline_mode = #tpu.pipeline_mode<synchronous>, transform_indices = @transform_1, window_bounds = array<i64: 5, 1>}, {transform_indices = @transform_2, window_bounds = array<i64: 1, 1>}, {transform_indices = @transform_3, window_bounds = array<i64: 1, 128>}]} {
    %c0 = arith.constant 0 : index
    %c0_0 = arith.constant 0 : index
    %0 = vector.load %arg1[%c0, %c0_0] : memref<5x128xf32, #tpu.memory_space<vmem>>, vector<5x128xf32>
    %c0_1 = arith.constant 0 : index
    %c0_2 = arith.constant 0 : index
    %1 = vector.load %arg2[%c0_1, %c0_2] : memref<5x1xf32, #tpu.memory_space<vmem>>, vector<5x1xf32>
    %c0_3 = arith.constant 0 : index
    %c0_4 = arith.constant 0 : index
    %2 = memref.load %arg3[%c0_3, %c0_4] : memref<1x1xf32, #tpu.memory_space<smem>>
    %3 = vector.broadcast %1 : vector<5x1xf32> to vector<5x128xf32>
    %4 = arith.mulf %0, %3 : vector<5x128xf32>
    %cst = arith.constant dense<0.000000e+00> : vector<128xf32>
    %5 = vector.multi_reduction <add>, %4, %cst [0] : vector<5x128xf32> to vector<128xf32>
    %6 = vector.shape_cast %5 : vector<128xf32> to vector<1x128xf32>
    %7 = vector.broadcast %2 : f32 to vector<1x128xf32>
    %8 = arith.addf %6, %7 : vector<1x128xf32>
    %9 = arith.negf %8 : vector<1x128xf32>
    %10 = math.exp %9 : vector<1x128xf32>
    %cst_5 = arith.constant 1.000000e+00 : f32
    %11 = vector.broadcast %cst_5 : f32 to vector<1x128xf32>
    %12 = arith.addf %11, %10 : vector<1x128xf32>
    %13 = arith.divf %11, %12 : vector<1x128xf32>
    %c0_6 = arith.constant 0 : index
    %c0_7 = arith.constant 0 : index
    %14 = vector.load %arg4[%c0_6, %c0_7] : memref<1x128xf32, #tpu.memory_space<vmem>>, vector<1x128xf32>
    tpu.vector_store %arg4[%c0_6, %c0_7], %13 {strides = array<i32>} : memref<1x128xf32, #tpu.memory_space<vmem>>, vector<1x128xf32>,
    return
  }
  func.func @transform_0(%arg0: i32) -> (i32, i32) {
    %c0_i32 = arith.constant 0 : i32
    %c0_i32_0 = arith.constant 0 : i32
    return %c0_i32, %arg0 : i32, i32
  }
  func.func @transform_1(%arg0: i32) -> (i32, i32) {
    %c0_i32 = arith.constant 0 : i32
    %c0_i32_0 = arith.constant 0 : i32
    %c0_i32_1 = arith.constant 0 : i32
    return %c0_i32, %c0_i32_0 : i32, i32
  }
  func.func @transform_2(%arg0: i32) -> (i32, i32) {
    %c0_i32 = arith.constant 0 : i32
    %c0_i32_0 = arith.constant 0 : i32
    %c0_i32_1 = arith.constant 0 : i32
    return %c0_i32, %c0_i32_0 : i32, i32
  }
  func.func @transform_3(%arg0: i32) -> (i32, i32) {
    %c0_i32 = arith.constant 0 : i32
    %c0_i32_0 = arith.constant 0 : i32
    return %c0_i32, %arg0 : i32, i32
  }
}

</mosaic_0001>

<llo_original>
// kernel: tpu_custom_call.1
$region0: #{tpu_custom_call.1}
  #allocation0 [shape = 'u32[]', space=smem, size = 0x4, offset = 0x4, fixed_abs, tag = 'smem constant byte address 0x4 - core index']
  #allocation1 [shape = 'u32[72,128]{1,0:T(1,128)}', space=vmem, size = 0x9000, scoped, tag = 'internal scratch']
  #allocation2 [shape = 'f32[1,1]{1,0:T(1,128)S(6)}', space=smem, size = 0x200, scoped, tag = 'scoped memory for tpu_custom_call.1']
  %s0 = inlined_call_operand.vmem [shape: f32[5,128], index: 0, kind: input, shape index: {}]
  %s1 = inlined_call_operand.vmem [shape: f32[5,1], index: 1, kind: input, shape index: {}]
  %s2 = inlined_call_operand.<no memory space> [shape: f32[1,1], index: 2, kind: input, shape index: {}]
  %s3 = inlined_call_operand.hbm [shape: f32[1,128], index: 3, kind: output, shape index: {}]
  %s4 = sld [smem:[#allocation0]]
  $region22: #{tpu_custom_call.1} parent=0
    _
  %s6 = ssub.s32 1, %s4
  %s7 = scalar_select 0, %s6, %s4
  %8 = sst [smem:[#allocation2]] %s2
  $region1: #{tpu_custom_call.1} parent=0
    #allocation3 [shape = 'u8[512]{0}', space=vmem, size = 0x400, scoped, tag = 'output window, operand 0, single buffered']
    #allocation4 [shape = 's32[1]{0}', space=sflag, size = 0x4, scoped, tag = 'scoped memory for tpu_custom_call.1']
    %9 = vsyncpa [#allocation4], 0
    // Predicated region
    $region2: #{tpu_custom_call.1} parent=1 // pred_check
      _
    $region3: #{tpu_custom_call.1} parent=1 // pred_check_branch
      %11 = sbr.rel (0) target = $region5
    $region4: #{tpu_custom_call.1} parent=1 // pred_region
      _
    $region5: #{tpu_custom_call.1} parent=1 // pred_fallthru
      _
    // Predicated region
    $region6: #{tpu_custom_call.1} parent=1 // pred_check
      _
    $region7: #{tpu_custom_call.1} parent=1 // pred_check_branch
      %13 = sbr.rel (0) target = $region9
    $region8: #{tpu_custom_call.1} parent=1 // pred_region
      _
    $region9: #{tpu_custom_call.1} parent=1 // pred_fallthru
      _
    // Predicated region
    $region10: #{tpu_custom_call.1} parent=1 // pred_check
      _
    $region11: #{tpu_custom_call.1} parent=1 // pred_check_branch
      %15 = sbr.rel (0) target = $region13
    $region12: #{tpu_custom_call.1} parent=1 // pred_region
      _
    $region13: #{tpu_custom_call.1} parent=1 // pred_fallthru
      _
    %v16 = vld [vmem:[%s0] sm:$0x1f]
    %v17 = vld [vmem:[%s1] sm:$0x1f]
    %s18 = sld [smem:[#allocation2]]
    %20 = vset.pattern.permute.xlu0 0
    %21 = vperm.xlu0 %20, %v17
    %v22 = vpop.permute.xlu0 %21
    %v24 = vmul.f32 %v16, %v22
    %vm25 = vcmask 1044480
    %v26 = vsel %vm25, %v24, 0.0
    %v27 = vrot.slane %v26, 4
    %v28 = vadd.f32 %v26, %v27
    %v29 = vrot.slane %v28, 2
    %v30 = vadd.f32 %v28, %v29
    %v31 = vrot.slane %v30, 1
    %v32 = vadd.f32 %v30, %v31
    %v33 = vstv %s18
    %v34 = vadd.f32 %v32, %v33
    %v35 = vxor.u32 %v34, 2147483648
    %v36 = vmul.f32 %v35, 1.442695
    %v37 = vpow.pop %v36
    %v38 = vadd.f32 %v37, 1.0
    %v39 = vrcp.pop %v38
    %v40 = vmul.f32 %v38, %v39
    %v41 = vsub.f32 1.0, %v40
    %v42 = vmul.f32 %v39, %v41
    %v43 = vadd.f32 %v39, %v42
    %vm44 = vweird.f32 %v38
    %vm45 = vweird.f32 %v39
    %vm46 = vmor %vm44, %vm45
    %v47 = vsel %vm46, %v39, %v43
    %v48 = vand.u32 2147483647, %v38
    %vm49 = vcmp.eq.f32.partialorder %v48, 8.507059e+37
    %v50 = vand.u32 %v38, 2147483648
    %v51 = vor.u32 1.1754944e-38, %v50
    %v52 = vsel %vm49, %v51, %v47
    %v53 = vmul.f32 1.0, %v52
    %54 = vst [vmem:[#allocation3] sm:$0x1] %v53
    // Predicated region
    $region14: #{tpu_custom_call.1} parent=1 // pred_check
      _
    $region15: #{tpu_custom_call.1} parent=1 // pred_check_branch
      %56 = sbr.rel (0) target = $region17
    $region16: #{tpu_custom_call.1} parent=1 // pred_region
      %58 = vsyncadd [#allocation4], 0
      %s60 = sshll.u32 [#allocation3], 4
      %s61 = int_to_ptr.vmem [resolvable:$true] %s60
      %s62 = sshll.u32 %s3, 4
      %s63 = int_to_ptr.hbm [resolvable:$true] %s62
      %65 = dma.vmem_to_hbm [thread:$0]  %s61, 16, %s63, [#allocation4]
    $region17: #{tpu_custom_call.1} parent=1 // pred_fallthru
      _
    // Predicated region
    $region18: #{tpu_custom_call.1} parent=1 // pred_check
      _
    $region19: #{tpu_custom_call.1} parent=1 // pred_check_branch
      %67 = sbr.rel (0) target = $region21
    $region20: #{tpu_custom_call.1} parent=1 // pred_region
      %69 = dma.done [#allocation4], 16
    $region21: #{tpu_custom_call.1} parent=1 // pred_fallthru
      _
    %70 = vsyncpa [#allocation4], 1

</llo_original>
